<compile_context>
chip_gen: v7x
topology: tpu7x:2x2x1
jax: 0.10.0
libtpu: 0.0.40
codegen_flags: <defaults>
</compile_context>

<pallas_src>
import jax
import jax.numpy as jnp
from jax.experimental import pallas as pl
from jax.experimental.pallas import tpu as pltpu

LANES = 128      # vreg lane width: all matmul N-dims padded to this
SUBLANES = 8     # f32 sublane count


def _round_up(n, m):
    return ((n + m - 1) // m) * m


def _make_kernel(ni_pad, hk):
    """Fused 2-layer-tanh MLP + fused (mean|value) head for one batch tile."""

    def kernel(x_ref, w_ref, out_ref):
        # x_ref   : [tile_b, ni_pad]
        # w_ref   : [ni_pad + 2*hk + 8, 128]  rows = [W1 | W2 | W_head | biases]
        # out_ref : [tile_b, 128]             cols [0:no] = mean, col no = value
        x = x_ref[...]

        w1 = w_ref[0:ni_pad, :]                         # [ni_pad, 128]
        w2 = w_ref[ni_pad:ni_pad + hk, :]               # [hk, 128]
        wh = w_ref[ni_pad + hk:ni_pad + 2 * hk, :]      # [hk, 128]
        b = w_ref[ni_pad + 2 * hk:ni_pad + 2 * hk + SUBLANES, :]
        b1 = b[0:1, :]
        b2 = b[1:2, :]
        bh = b[2:3, :]

        # affine1 -> tanh  (padded lanes stay exactly 0)
        h1 = jnp.tanh(jnp.dot(x, w1, preferred_element_type=jnp.float32) + b1)
        # affine2 -> tanh  (only the hk meaningful K lanes are fed to the MXU)
        h2 = jnp.tanh(
            jnp.dot(h1[:, :hk], w2, preferred_element_type=jnp.float32) + b2)
        # fused heads: [action_mean | value | zero pad], lane-dense writeback
        out_ref[...] = (
            jnp.dot(h2[:, :hk], wh, preferred_element_type=jnp.float32) + bh)

    return kernel


def pack_params(params, num_inputs, num_outputs, hidden=64):
    """Pack all weights AND biases into one (ni_pad + 2*hk + 8, 128) f32 slab."""
    assert num_outputs + 1 <= LANES, "fused head must fit in 128 lanes"
    assert hidden <= LANES, "hidden must fit in 128 lanes"
    ni_pad = _round_up(num_inputs, SUBLANES)
    hk = _round_up(hidden, SUBLANES)

    w1 = jnp.zeros((ni_pad, LANES), jnp.float32)
    w1 = w1.at[:num_inputs, :hidden].set(params["w1"])

    w2 = jnp.zeros((hk, LANES), jnp.float32)
    w2 = w2.at[:hidden, :hidden].set(params["w2"])

    wh = jnp.zeros((hk, LANES), jnp.float32)
    wh = wh.at[:hidden, :num_outputs].set(params["wm"])
    wh = wh.at[:hidden, num_outputs].set(params["wv"][:, 0])

    b = jnp.zeros((SUBLANES, LANES), jnp.float32)
    b = b.at[0, :hidden].set(params["b1"][0])
    b = b.at[1, :hidden].set(params["b2"][0])
    b = b.at[2, :num_outputs].set(params["bm"][0])
    b = b.at[2, num_outputs].set(params["bv"][0, 0])

    return jnp.concatenate([w1, w2, wh, b], axis=0)   # [ni_pad + 2*hk + 8, 128]


def a3c_actor_forward(x, w_slab, logstd, num_inputs, num_outputs,
                      hidden=64, tile_b=256):
    """A3CActor forward: returns (action_mean, action_log_std, action_std, value).

    Batch many environments per call (B >= 128) so the kernel is compute- /
    bandwidth-bound rather than launch-overhead bound.
    """
    ni_pad = _round_up(num_inputs, SUBLANES)
    hk = _round_up(hidden, SUBLANES)
    assert w_slab.shape == (ni_pad + 2 * hk + SUBLANES, LANES)

    B = x.shape[0]
    tb = min(_round_up(tile_b, SUBLANES), _round_up(B, SUBLANES))
    B_pad = _round_up(B, tb)

    if x.shape != (B_pad, ni_pad):
        # In a tight rollout loop, keep the observation buffer pre-padded to
        # (B_pad, ni_pad) so this pad (an extra HBM round trip) is skipped.
        x = jnp.pad(x, ((0, B_pad - B), (0, ni_pad - x.shape[1])))

    grid = (B_pad // tb,)
    kernel = _make_kernel(ni_pad, hk)

    flops = 2 * B_pad * (ni_pad * LANES + hk * LANES + hk * LANES)
    cost = pl.CostEstimate(
        flops=flops,
        transcendentals=2 * B_pad * LANES,          # two tanh layers
        bytes_accessed=4 * (B_pad * ni_pad + w_slab.size + B_pad * LANES),
    )

    out = pl.pallas_call(
        kernel,
        out_shape=jax.ShapeDtypeStruct((B_pad, LANES), jnp.float32),
        grid=grid,
        in_specs=[
            # batch-row tile of x, marches with the grid
            pl.BlockSpec((tb, ni_pad), lambda i: (i, 0)),
            # full weight+bias slab; constant index_map -> stays VMEM-resident
            # across all grid steps (no re-DMA per tile)
            pl.BlockSpec(w_slab.shape, lambda i: (0, 0)),
        ],
        out_specs=pl.BlockSpec((tb, LANES), lambda i: (i, 0)),
        compiler_params=pltpu.CompilerParams(
            dimension_semantics=("parallel",)),      # megacore sharding on v7x
        cost_estimate=cost,
    )(x, w_slab)

    # Slice the lane-dense output slab back apart (drop batch/lane padding).
    action_mean = out[:B, :num_outputs]
    value = out[:B, num_outputs:num_outputs + 1]

    # log_std / std are x-independent; compute once outside the kernel.
    action_log_std = jnp.broadcast_to(logstd, action_mean.shape)
    action_std = jnp.exp(action_log_std)
    return action_mean, action_log_std, action_std, value


def init_params(key, num_inputs, num_outputs, hidden=64):
    """Deterministic init mirroring PyTorch nn.Linear defaults.

    nn.Linear(in, out): weight, bias ~ U(-1/sqrt(in), 1/sqrt(in)).
    action_mean.weight *= 0.1; the PyTorch code calls bias.data.mul(0.0)
    (NOT in-place), so the bias is left unchanged -- reproduced here.
    action_log_std = zeros(1, num_outputs).  Weights stored as (in, out).
    """
    ks = jax.random.split(key, 8)

    def linear(kw, kb, fan_in, fan_out):
        bound = 1.0 / jnp.sqrt(jnp.float32(fan_in))
        w = jax.random.uniform(kw, (fan_in, fan_out), jnp.float32, -bound, bound)
        b = jax.random.uniform(kb, (1, fan_out), jnp.float32, -bound, bound)
        return w, b

    w1, b1 = linear(ks[0], ks[1], num_inputs, hidden)
    w2, b2 = linear(ks[2], ks[3], hidden, hidden)
    wm, bm = linear(ks[4], ks[5], hidden, num_outputs)
    wm = wm * 0.1  # action_mean.weight.data.mul_(0.1)
    # bm intentionally unchanged (mul, not mul_)
    wv, bv = linear(ks[6], ks[7], hidden, 1)
    logstd = jnp.zeros((1, num_outputs), jnp.float32)

    return {
        "w1": w1, "b1": b1,
        "w2": w2, "b2": b2,
        "wm": wm, "bm": bm,
        "wv": wv, "bv": bv,
        "logstd": logstd,
    }


def reference_forward(x, p):
    h1 = jnp.tanh(x @ p["w1"] + p["b1"])
    h2 = jnp.tanh(h1 @ p["w2"] + p["b2"])
    mean = h2 @ p["wm"] + p["bm"]
    log_std = jnp.broadcast_to(p["logstd"], mean.shape)
    std = jnp.exp(log_std)
    value = h2 @ p["wv"] + p["bv"]
    return mean, log_std, std, value


if __name__ == "__main__":
    key = jax.random.PRNGKey(0)
    k_param, k_x = jax.random.split(key)

    # Batch 512 environments into one call (2 grid tiles of 256 rows) so the
    # kernel is not per-step launch-overhead bound.
    B, num_inputs, num_outputs, hidden = 512, 32, 8, 64
    params = init_params(k_param, num_inputs, num_outputs, hidden)
    # Produce x already at the padded (B_pad, ni_pad) layout (here 512x32),
    # so no wrapper-side jnp.pad is needed in the hot path.
    x = jax.random.normal(k_x, (B, num_inputs), jnp.float32)

    # Pack once (amortized across rollout steps).
    w_slab = pack_params(params, num_inputs, num_outputs, hidden)

    outs = a3c_actor_forward(x, w_slab, params["logstd"],
                             num_inputs, num_outputs, hidden, tile_b=256)
    outs = jax.block_until_ready(outs)

    refs = reference_forward(x, params)
    for o, r in zip(outs, refs):
        assert o.shape == r.shape and o.dtype == r.dtype, (o.shape, r.shape)
        assert jnp.allclose(o, r, atol=1e-5, rtol=1e-5)

    print("KERNEL_OK")
</pallas_src>

<mosaic_0001>
module attributes {stable_mosaic.version = 11 : i64} {
  func.func @kernel(%arg0: i32, %arg1: memref<256x32xf32, #tpu.memory_space<vmem>>, %arg2: memref<168x128xf32, #tpu.memory_space<vmem>>, %arg3: memref<256x128xf32, #tpu.memory_space<vmem>>) attributes {dimension_semantics = [#tpu.dimension_semantics<parallel>], iteration_bounds = array<i64: 2>, scalar_prefetch = 0 : i64, scratch_operands = 0 : i64, tpu.core_type = #tpu.core_type<tc>, window_params = [{transform_indices = @transform_0, window_bounds = array<i64: 256, 32>}, {pipeline_mode = #tpu.pipeline_mode<synchronous>, transform_indices = @transform_1, window_bounds = array<i64: 168, 128>}, {transform_indices = @transform_2, window_bounds = array<i64: 256, 128>}]} {
    %c0 = arith.constant 0 : index
    %c0_0 = arith.constant 0 : index
    %0 = vector.load %arg1[%c0, %c0_0] : memref<256x32xf32, #tpu.memory_space<vmem>>, vector<256x32xf32>
    %c0_1 = arith.constant 0 : index
    %c0_2 = arith.constant 0 : index
    %1 = vector.load %arg2[%c0_1, %c0_2] : memref<168x128xf32, #tpu.memory_space<vmem>>, vector<32x128xf32>
    %c32 = arith.constant 32 : index
    %c0_3 = arith.constant 0 : index
    %2 = vector.load %arg2[%c32, %c0_3] : memref<168x128xf32, #tpu.memory_space<vmem>>, vector<64x128xf32>
    %c96 = arith.constant 96 : index
    %c0_4 = arith.constant 0 : index
    %3 = vector.load %arg2[%c96, %c0_4] : memref<168x128xf32, #tpu.memory_space<vmem>>, vector<64x128xf32>
    %c160 = arith.constant 160 : index
    %c0_5 = arith.constant 0 : index
    %4 = vector.load %arg2[%c160, %c0_5] : memref<168x128xf32, #tpu.memory_space<vmem>>, vector<8x128xf32>
    %5 = vector.extract_strided_slice %4 {offsets = [0, 0], sizes = [1, 128], strides = [1, 1]} : vector<8x128xf32> to vector<1x128xf32>
    %6 = vector.extract_strided_slice %4 {offsets = [1, 0], sizes = [1, 128], strides = [1, 1]} : vector<8x128xf32> to vector<1x128xf32>
    %7 = vector.extract_strided_slice %4 {offsets = [2, 0], sizes = [1, 128], strides = [1, 1]} : vector<8x128xf32> to vector<1x128xf32>
    %cst = arith.constant dense<0.000000e+00> : vector<256x128xf32>
    %8 = tpu.matmul %0, %1, %cst {dimension_numbers = #tpu.dot_dimension_numbers<[1], [0], [0], [1], [0, 0, 1, 1], [], []>} : vector<256x32xf32>, vector<32x128xf32>, vector<256x128xf32> -> vector<256x128xf32>
    %9 = vector.broadcast %5 : vector<1x128xf32> to vector<256x128xf32>
    %10 = arith.addf %8, %9 : vector<256x128xf32>
    %11 = math.tanh %10 : vector<256x128xf32>
    %12 = vector.extract_strided_slice %11 {offsets = [0, 0], sizes = [256, 64], strides = [1, 1]} : vector<256x128xf32> to vector<256x64xf32>
    %cst_6 = arith.constant dense<0.000000e+00> : vector<256x128xf32>
    %13 = tpu.matmul %12, %2, %cst_6 {dimension_numbers = #tpu.dot_dimension_numbers<[1], [0], [0], [1], [0, 0, 1, 1], [], []>} : vector<256x64xf32>, vector<64x128xf32>, vector<256x128xf32> -> vector<256x128xf32>
    %14 = vector.broadcast %6 : vector<1x128xf32> to vector<256x128xf32>
    %15 = arith.addf %13, %14 : vector<256x128xf32>
    %16 = math.tanh %15 : vector<256x128xf32>
    %17 = vector.extract_strided_slice %16 {offsets = [0, 0], sizes = [256, 64], strides = [1, 1]} : vector<256x128xf32> to vector<256x64xf32>
    %cst_7 = arith.constant dense<0.000000e+00> : vector<256x128xf32>
    %18 = tpu.matmul %17, %3, %cst_7 {dimension_numbers = #tpu.dot_dimension_numbers<[1], [0], [0], [1], [0, 0, 1, 1], [], []>} : vector<256x64xf32>, vector<64x128xf32>, vector<256x128xf32> -> vector<256x128xf32>
    %19 = vector.broadcast %7 : vector<1x128xf32> to vector<256x128xf32>
    %20 = arith.addf %18, %19 : vector<256x128xf32>
    %c0_8 = arith.constant 0 : index
    %c0_9 = arith.constant 0 : index
    %21 = vector.load %arg3[%c0_8, %c0_9] : memref<256x128xf32, #tpu.memory_space<vmem>>, vector<256x128xf32>
    tpu.vector_store %arg3[%c0_8, %c0_9], %20 {strides = array<i32>} : memref<256x128xf32, #tpu.memory_space<vmem>>, vector<256x128xf32>,
    return
  }
  func.func @transform_0(%arg0: i32) -> (i32, i32) {
    %c0_i32 = arith.constant 0 : i32
    %c0_i32_0 = arith.constant 0 : i32
    return %arg0, %c0_i32 : i32, i32
  }
  func.func @transform_1(%arg0: i32) -> (i32, i32) {
    %c0_i32 = arith.constant 0 : i32
    %c0_i32_0 = arith.constant 0 : i32
    %c0_i32_1 = arith.constant 0 : i32
    return %c0_i32, %c0_i32_0 : i32, i32
  }
  func.func @transform_2(%arg0: i32) -> (i32, i32) {
    %c0_i32 = arith.constant 0 : i32
    %c0_i32_0 = arith.constant 0 : i32
    return %arg0, %c0_i32 : i32, i32
  }
}

</mosaic_0001>

<llo_original>
// kernel: tpu_custom_call.1
$region0: #{tpu_custom_call.1}
  #allocation0 [shape = 'u32[]', space=smem, size = 0x4, offset = 0x4, fixed_abs, tag = 'smem constant byte address 0x4 - core index']
  #allocation1 [shape = 'u32[144,128]{1,0:T(1,128)}', space=vmem, size = 0x12000, scoped, tag = 'internal scratch']
  %s0 = inlined_call_operand.vmem [shape: f32[512,32], index: 0, kind: input, shape index: {}]
  %s1 = inlined_call_operand.vmem [shape: f32[168,128], index: 1, kind: input, shape index: {}]
  %s2 = inlined_call_operand.hbm [shape: f32[512,128], index: 2, kind: output, shape index: {}]
  %s3 = sld [smem:[#allocation0]]
  $region41: #{tpu_custom_call.1} parent=0
    _
  %s5 = ssub.s32 1, %s3
  %s6 = scalar_select 0, %s5, %s3
  $region1: #{tpu_custom_call.1} parent=0
    #allocation2 [shape = 'u8[262144]{0}', space=vmem, size = 0x40000, scoped, tag = 'output window, operand 0']
    #allocation3 [shape = 's32[2]{0}', space=sflag, size = 0x8, scoped, tag = 'scoped memory for tpu_custom_call.1']
    %7 = vsyncpa [#allocation3], 0
    %s8 = scalar_lea.sflag [#allocation3], 1
    %9 = vsyncpa %s8, 0
    loop: start=0, step=1, limit=4
    $region2: #{tpu_custom_call.1} parent=1 // loop_pre_header
      _
    $region3: #{tpu_custom_call.1} parent=1 // loop_header
      %s11 = sphi 0, %s15
      %p12 = scmp.ge.s32.totalorder %s11, 4
      %s21 = sphi 0, %s23
      %s24 = sphi 0, %s21
      %s25 = sphi 0, %s24
      %s41 = sphi 0, %s25
      %s45 = sphi 0, %s45
      %s47 = sphi 0, %s45
      %s48 = sphi 0, %s47
      %s62 = sphi 0, %s48
      %s68 = sphi 0, %s70
      %s71 = sphi 0, %s68
      %s72 = sphi 0, %s71
      %s88 = sphi 0, %s72
    $region4: #{tpu_custom_call.1} parent=1 // loop_header_branch
      %14 = sbr.rel (%p12) target = $region8
    $region5: #{tpu_custom_call.1} parent=1 // loop_body
      %s16 = ssub.s32 %s11, 1
      %s17 = ssub.s32 %s11, 2
      %s18 = sadd.s32 %s11, 1
      %s19 = ssub.s32 %s11, %s18
      %p20 = scmp.eq.s32.totalorder %s19, 0
      %s22 = sadd.s32 %s21, 1
      %s23 = scalar_select %p20, %s21, %s22
      %p26 = pneg %p20
      %p27 = scmp.eq.s32.totalorder %s11, 1
      %p28 = por %p26, %p27
      %p29 = scmp.ne.s32.totalorder %s21, %s24
      %p30 = scmp.eq.s32.totalorder %s11, 0
      %p31 = por %p29, %p30
      %p32 = scmp.ne.s32.totalorder %s21, %s24
      %p33 = scmp.eq.s32.totalorder %s16, 1
      %p34 = por %p32, %p33
      %p35 = scmp.ne.s32.totalorder %s24, %s25
      %p36 = scmp.eq.s32.totalorder %s16, 0
      %p37 = por %p35, %p36
      %p38 = scmp.ne.s32.totalorder %s24, %s25
      %p39 = scmp.eq.s32.totalorder %s17, 1
      %p40 = por %p38, %p39
      %p42 = scmp.ne.s32.totalorder %s25, %s41
      %p43 = scmp.eq.s32.totalorder %s17, 0
      %p44 = por %p42, %p43
      %s46 = sadd.s32 %s45, 1
      %p49 = scmp.eq.s32.totalorder %s11, 1
      %p50 = scmp.ne.s32.totalorder %s45, %s47
      %p51 = scmp.eq.s32.totalorder %s11, 0
      %p52 = por %p50, %p51
      %p53 = scmp.ne.s32.totalorder %s45, %s47
      %p54 = scmp.eq.s32.totalorder %s16, 1
      %p55 = por %p53, %p54
      %p56 = scmp.ne.s32.totalorder %s47, %s48
      %p57 = scmp.eq.s32.totalorder %s16, 0
      %p58 = por %p56, %p57
      %p59 = scmp.ne.s32.totalorder %s47, %s48
      %p60 = scmp.eq.s32.totalorder %s17, 1
      %p61 = por %p59, %p60
      %p63 = scmp.ne.s32.totalorder %s48, %s62
      %p64 = scmp.eq.s32.totalorder %s17, 0
      %p65 = por %p63, %p64
      %s66 = ssub.s32 %s11, %s18
      %p67 = scmp.eq.s32.totalorder %s66, 0
      %s69 = sadd.s32 %s68, 1
      %s70 = scalar_select %p67, %s68, %s69
      %p73 = pneg %p67
      %p74 = scmp.eq.s32.totalorder %s11, 1
      %p75 = por %p73, %p74
      %p76 = scmp.ne.s32.totalorder %s68, %s71
      %p77 = scmp.eq.s32.totalorder %s11, 0
      %p78 = por %p76, %p77
      %p79 = scmp.ne.s32.totalorder %s68, %s71
      %p80 = scmp.eq.s32.totalorder %s16, 1
      %p81 = por %p79, %p80
      %p82 = scmp.ne.s32.totalorder %s71, %s72
      %p83 = scmp.eq.s32.totalorder %s16, 0
      %p84 = por %p82, %p83
      %p85 = scmp.ne.s32.totalorder %s71, %s72
      %p86 = scmp.eq.s32.totalorder %s17, 1
      %p87 = por %p85, %p86
      %p89 = scmp.ne.s32.totalorder %s72, %s88
      %p90 = scmp.eq.s32.totalorder %s17, 0
      %p91 = por %p89, %p90
      %p92 = scmp.le.s32.totalorder 1, %s11
      %p93 = scmp.lt.s32.totalorder %s11, 3
      %p94 = pnand %p92, %p93
      %p95 = pneg %p94
      // Predicated region
      $region9: #{tpu_custom_call.1} parent=5 // pred_check
        _
      $region10: #{tpu_custom_call.1} parent=5 // pred_check_branch
        %97 = sbr.rel (%p94) target = $region12
      $region11: #{tpu_custom_call.1} parent=5 // pred_region
        %s98 = ssub.s32 %s11, 1
        // Predicated region
        $region13: #{tpu_custom_call.1} parent=11 // pred_check
          %p99 = pneg %p58
        $region14: #{tpu_custom_call.1} parent=11 // pred_check_branch
          %101 = sbr.rel (%p99) target = $region16
        $region15: #{tpu_custom_call.1} parent=11 // pred_region
          _
        $region16: #{tpu_custom_call.1} parent=11 // pred_fallthru
          _
      $region12: #{tpu_custom_call.1} parent=5 // pred_fallthru
        _
      %p102 = scmp.lt.s32.totalorder %s11, 2
      // Predicated region
      $region17: #{tpu_custom_call.1} parent=5 // pred_check
        %p103 = pneg %p102
      $region18: #{tpu_custom_call.1} parent=5 // pred_check_branch
        %105 = sbr.rel (%p103) target = $region20
      $region19: #{tpu_custom_call.1} parent=5 // pred_region
        // Predicated region
        $region21: #{tpu_custom_call.1} parent=19 // pred_check
          %p106 = pneg %p31
        $region22: #{tpu_custom_call.1} parent=19 // pred_check_branch
          %108 = sbr.rel (%p106) target = $region24
        $region23: #{tpu_custom_call.1} parent=19 // pred_region
          %s109 = smul.u32 32, %s11
          %p110 = scmp.lt.s32.totalorder %s109, 63
          %s111 = scalar_select %p110, %s109, 63
          %s112 = smul.addr %s111, 8
          %s113 = scalar_lea.vmem %s0, %s112
          %s114 = smul.u32 32, %s11
        $region24: #{tpu_custom_call.1} parent=19 // pred_fallthru
          _
      $region20: #{tpu_custom_call.1} parent=5 // pred_fallthru
        _
      %p115 = scmp.le.s32.totalorder 1, %s11
      %p116 = scmp.lt.s32.totalorder %s11, 3
      %p117 = pnand %p115, %p116
      %p118 = pneg %p117
      // Predicated region
      $region25: #{tpu_custom_call.1} parent=5 // pred_check
        _
      $region26: #{tpu_custom_call.1} parent=5 // pred_check_branch
        %120 = sbr.rel (%p117) target = $region28
      $region27: #{tpu_custom_call.1} parent=5 // pred_region
        %s121 = ssub.s32 %s11, 1
        %s122 = smul.u32 32, %s16
        %p123 = scmp.lt.s32.totalorder %s122, 63
        %s124 = scalar_select %p123, %s122, 63
        %s125 = smul.addr %s124, 8
        %s126 = scalar_lea.vmem %s0, %s125
        %p127 = pneg %p37
        %p128 = pneg %p34
        %p129 = pneg %p58
        %p130 = pneg %p55
        %p131 = pneg %p84
        %p132 = pneg %p81
        %s133 = sand.u32 %s71, 1
        %s134 = scalar_lea.sflag [#allocation3], %s133
        %s135 = sand.u32 %s71, 1
        %s136 = smul.addr %s135, 256
        %s137 = scalar_lea.vmem [#allocation2], %s136
        %s138 = smul.u32 32, %s16
        %p139 = scmp.lt.s32.totalorder %s138, 63
        %s140 = scalar_select %p139, %s138, 63
        %s141 = smul.addr %s140, 8
        %s142 = scalar_lea.vmem %s0, %s141
        %s143 = smul.u32 32, %s16
        %s144 = smul.u32 32, %s16
        %v145 = vld [vmem:[%s142] sm:$0xff]
        %v146 = vld [vmem:[%s142 + $0x8] sm:$0xff]
        %v147 = vld [vmem:[%s142 + $0x10] sm:$0xff]
        %v148 = vld [vmem:[%s142 + $0x18] sm:$0xff]
        %v149 = vld [vmem:[%s142 + $0x20] sm:$0xff]
        %v150 = vld [vmem:[%s142 + $0x28] sm:$0xff]
        %v151 = vld [vmem:[%s142 + $0x30] sm:$0xff]
        %v152 = vld [vmem:[%s142 + $0x38] sm:$0xff]
        %v153 = vld [vmem:[%s142 + $0x40] sm:$0xff]
        %v154 = vld [vmem:[%s142 + $0x48] sm:$0xff]
        %v155 = vld [vmem:[%s142 + $0x50] sm:$0xff]
        %v156 = vld [vmem:[%s142 + $0x58] sm:$0xff]
        %v157 = vld [vmem:[%s142 + $0x60] sm:$0xff]
        %v158 = vld [vmem:[%s142 + $0x68] sm:$0xff]
        %v159 = vld [vmem:[%s142 + $0x70] sm:$0xff]
        %v160 = vld [vmem:[%s142 + $0x78] sm:$0xff]
        %v161 = vld [vmem:[%s142 + $0x80] sm:$0xff]
        %v162 = vld [vmem:[%s142 + $0x88] sm:$0xff]
        %v163 = vld [vmem:[%s142 + $0x90] sm:$0xff]
        %v164 = vld [vmem:[%s142 + $0x98] sm:$0xff]
        %v165 = vld [vmem:[%s142 + $0xa0] sm:$0xff]
        %v166 = vld [vmem:[%s142 + $0xa8] sm:$0xff]
        %v167 = vld [vmem:[%s142 + $0xb0] sm:$0xff]
        %v168 = vld [vmem:[%s142 + $0xb8] sm:$0xff]
        %v169 = vld [vmem:[%s142 + $0xc0] sm:$0xff]
        %v170 = vld [vmem:[%s142 + $0xc8] sm:$0xff]
        %v171 = vld [vmem:[%s142 + $0xd0] sm:$0xff]
        %v172 = vld [vmem:[%s142 + $0xd8] sm:$0xff]
        %v173 = vld [vmem:[%s142 + $0xe0] sm:$0xff]
        %v174 = vld [vmem:[%s142 + $0xe8] sm:$0xff]
        %v175 = vld [vmem:[%s142 + $0xf0] sm:$0xff]
        %v176 = vld [vmem:[%s142 + $0xf8] sm:$0xff]
        %v177 = vld [vmem:[%s1] sm:$0xff]
        %v178 = vld [vmem:[%s1 + $0x8] sm:$0xff]
        %v179 = vld [vmem:[%s1 + $0x10] sm:$0xff]
        %v180 = vld [vmem:[%s1 + $0x18] sm:$0xff]
        %v181 = vld [vmem:[%s1 + $0x20] sm:$0xff]
        %v182 = vld [vmem:[%s1 + $0x28] sm:$0xff]
        %v183 = vld [vmem:[%s1 + $0x30] sm:$0xff]
        %v184 = vld [vmem:[%s1 + $0x38] sm:$0xff]
        %v185 = vld [vmem:[%s1 + $0x40] sm:$0xff]
        %v186 = vld [vmem:[%s1 + $0x48] sm:$0xff]
        %v187 = vld [vmem:[%s1 + $0x50] sm:$0xff]
        %v188 = vld [vmem:[%s1 + $0x58] sm:$0xff]
        %v189 = vld [vmem:[%s1 + $0x60] sm:$0xff]
        %v190 = vld [vmem:[%s1 + $0x68] sm:$0xff]
        %v191 = vld [vmem:[%s1 + $0x70] sm:$0xff]
        %v192 = vld [vmem:[%s1 + $0x78] sm:$0xff]
        %v193 = vld [vmem:[%s1 + $0x80] sm:$0xff]
        %v194 = vld [vmem:[%s1 + $0x88] sm:$0xff]
        %v195 = vld [vmem:[%s1 + $0x90] sm:$0xff]
        %v196 = vld [vmem:[%s1 + $0x98] sm:$0xff]
        %v197 = vld [vmem:[%s1 + $0xa0] sm:$0xff]
        %v198 = vlaneseq
        %v199 = vshrl.u32 %v198, 7
        %v200 = vsub.s32 0, %v199
        %v201 = vrot.slane %v197, %v200
        %vm202 = vcmask 261120
        %v204 = vsel %vm202, %v145, 0
        %v207 = vsel %vm202, %v146, 0
        %v210 = vsel %vm202, %v147, 0
        %v213 = vsel %vm202, %v148, 0
        %v216 = vsel %vm202, %v149, 0
        %v219 = vsel %vm202, %v150, 0
        %v222 = vsel %vm202, %v151, 0
        %v225 = vsel %vm202, %v152, 0
        %v228 = vsel %vm202, %v153, 0
        %v231 = vsel %vm202, %v154, 0
        %v234 = vsel %vm202, %v155, 0
        %v237 = vsel %vm202, %v156, 0
        %v240 = vsel %vm202, %v157, 0
        %v243 = vsel %vm202, %v158, 0
        %v246 = vsel %vm202, %v159, 0
        %v249 = vsel %vm202, %v160, 0
        %v252 = vsel %vm202, %v161, 0
        %v255 = vsel %vm202, %v162, 0
        %v258 = vsel %vm202, %v163, 0
        %v261 = vsel %vm202, %v164, 0
        %v264 = vsel %vm202, %v165, 0
        %v267 = vsel %vm202, %v166, 0
        %v270 = vsel %vm202, %v167, 0
        %v273 = vsel %vm202, %v168, 0
        %v276 = vsel %vm202, %v169, 0
        %v279 = vsel %vm202, %v170, 0
        %v282 = vsel %vm202, %v171, 0
        %v285 = vsel %vm202, %v172, 0
        %v288 = vsel %vm202, %v173, 0
        %v291 = vsel %vm202, %v174, 0
        %v294 = vsel %vm202, %v175, 0
        %v297 = vsel %vm202, %v176, 0
        %299 = vmatprep.subr.mxu0 0.0
        %300 = vmatpush1.msra.mxu0 %v177
        %301 = vmatprep.subr.mxu0 0.0
        %302 = vmatpush1.msra.mxu0 %v178
        %303 = vmatprep.subr.mxu0 0.0
        %304 = vmatpush1.msra.mxu0 %v179
        %305 = vmatprep.subr.mxu0 0.0
        %306 = vmatpush1.msra.mxu0 %v180
        %307 = vmatprep.subr.mxu0 0.0
        %308 = vmatpush1.msra.mxu0 0.0
        %309 = vmatprep.subr.mxu0 0.0
        %310 = vmatpush1.msra.mxu0 0.0
        %311 = vmatprep.subr.mxu0 0.0
        %312 = vmatpush1.msra.mxu0 0.0
        %313 = vmatprep.subr.mxu0 0.0
        %314 = vmatpush1.msra.mxu0 0.0
        %315 = vmatprep.subr.mxu0 0.0
        %316 = vmatpush1.msra.mxu0 0.0
        %317 = vmatprep.subr.mxu0 0.0
        %318 = vmatpush1.msra.mxu0 0.0
        %319 = vmatprep.subr.mxu0 0.0
        %320 = vmatpush1.msra.mxu0 0.0
        %321 = vmatprep.subr.mxu0 0.0
        %322 = vmatpush1.msra.mxu0 0.0
        %323 = vmatprep.subr.mxu0 0.0
        %324 = vmatpush1.msra.mxu0 0.0
        %325 = vmatprep.subr.mxu0 0.0
        %326 = vmatpush1.msra.mxu0 0.0
        %327 = vmatprep.subr.mxu0 0.0
        %328 = vmatpush1.msra.mxu0 0.0
        %329 = vmatprep.subr.mxu0 0.0
        %330 = vmatpush1.msra.mxu0 0.0
        %331 = vmatprep.subr.mxu0 0.0
        %332 = vmatpush1.msra.mxu0 0.0
        %333 = vmatprep.subr.mxu0 0.0
        %334 = vmatpush1.msra.mxu0 0.0
        %335 = vmatprep.subr.mxu0 0.0
        %336 = vmatpush1.msra.mxu0 0.0
        %337 = vmatprep.subr.mxu0 0.0
        %338 = vmatpush1.msra.mxu0 0.0
        %339 = vmatprep.subr.mxu0 0.0
        %340 = vmatpush1.msra.mxu0 0.0
        %341 = vmatprep.subr.mxu0 0.0
        %342 = vmatpush1.msra.mxu0 0.0
        %343 = vmatprep.subr.mxu0 0.0
        %344 = vmatpush1.msra.mxu0 0.0
        %345 = vmatprep.subr.mxu0 0.0
        %346 = vmatpush1.msra.mxu0 0.0
        %347 = vmatprep.subr.mxu0 0.0
        %348 = vmatpush1.msra.mxu0 0.0
        %349 = vmatprep.subr.mxu0 0.0
        %350 = vmatpush1.msra.mxu0 0.0
        %351 = vmatprep.subr.mxu0 0.0
        %352 = vmatpush1.msra.mxu0 0.0
        %353 = vmatprep.subr.mxu0 0.0
        %354 = vmatpush1.msra.mxu0 0.0
        %355 = vmatprep.subr.mxu0 0.0
        %356 = vmatpush1.msra.mxu0 0.0
        %357 = vmatprep.subr.mxu0 0.0
        %358 = vmatpush1.msra.mxu0 0.0
        %359 = vmatprep.subr.mxu0 0.0
        %360 = vmatpush1.msra.mxu0 0.0
        %361 = vmatprep.subr.mxu0 0.0
        %362 = vmatpush1.msra.mxu0 0.0
        %363 = vmatprep.mubr.f32.mxu0 0.0
        %364 = vmatmul.mubr.f32.gmra.mrb[0].mxu0 %v204
        %v365 = vpop.f32.mrb[0].mxu0
        %v366 = vadd.f32 %v201, %v365
        %v367 = vpop.f32.mrb[0].mxu0
        %368 = vmatprep.mubr.f32.mxu0 0.0
        %369 = vmatmul.mubr.f32.gmra.mrb[0].mxu0 %v207
        %v370 = vpop.f32.mrb[0].mxu0
        %v371 = vadd.f32 %v201, %v370
        %v372 = vpop.f32.mrb[0].mxu0
        %373 = vmatprep.mubr.f32.mxu0 0.0
        %374 = vmatmul.mubr.f32.gmra.mrb[0].mxu0 %v210
        %v375 = vpop.f32.mrb[0].mxu0
        %v376 = vadd.f32 %v201, %v375
        %v377 = vpop.f32.mrb[0].mxu0
        %378 = vmatprep.mubr.f32.mxu0 0.0
        %379 = vmatmul.mubr.f32.gmra.mrb[0].mxu0 %v213
        %v380 = vpop.f32.mrb[0].mxu0
        %v381 = vadd.f32 %v201, %v380
        %v382 = vpop.f32.mrb[0].mxu0
        %383 = vmatprep.mubr.f32.mxu0 0.0
        %384 = vmatmul.mubr.f32.gmra.mrb[0].mxu0 %v216
        %v385 = vpop.f32.mrb[0].mxu0
        %v386 = vadd.f32 %v201, %v385
        %v387 = vpop.f32.mrb[0].mxu0
        %388 = vmatprep.mubr.f32.mxu0 0.0
        %389 = vmatmul.mubr.f32.gmra.mrb[0].mxu0 %v219
        %v390 = vpop.f32.mrb[0].mxu0
        %v391 = vadd.f32 %v201, %v390
        %v392 = vpop.f32.mrb[0].mxu0
        %393 = vmatprep.mubr.f32.mxu0 0.0
        %394 = vmatmul.mubr.f32.gmra.mrb[0].mxu0 %v222
        %v395 = vpop.f32.mrb[0].mxu0
        %v396 = vadd.f32 %v201, %v395
        %v397 = vpop.f32.mrb[0].mxu0
        %398 = vmatprep.mubr.f32.mxu0 0.0
        %399 = vmatmul.mubr.f32.gmra.mrb[0].mxu0 %v225
        %v400 = vpop.f32.mrb[0].mxu0
        %v401 = vadd.f32 %v201, %v400
        %v402 = vpop.f32.mrb[0].mxu0
        %403 = vmatprep.mubr.f32.mxu0 0.0
        %404 = vmatmul.mubr.f32.gmra.mrb[0].mxu0 %v228
        %v405 = vpop.f32.mrb[0].mxu0
        %v406 = vadd.f32 %v201, %v405
        %v407 = vpop.f32.mrb[0].mxu0
        %408 = vmatprep.mubr.f32.mxu0 0.0
        %409 = vmatmul.mubr.f32.gmra.mrb[0].mxu0 %v231
        %v410 = vpop.f32.mrb[0].mxu0
        %v411 = vadd.f32 %v201, %v410
        %v412 = vpop.f32.mrb[0].mxu0
        %413 = vmatprep.mubr.f32.mxu0 0.0
        %414 = vmatmul.mubr.f32.gmra.mrb[0].mxu0 %v234
        %v415 = vpop.f32.mrb[0].mxu0
        %v416 = vadd.f32 %v201, %v415
        %v417 = vpop.f32.mrb[0].mxu0
        %418 = vmatprep.mubr.f32.mxu0 0.0
        %419 = vmatmul.mubr.f32.gmra.mrb[0].mxu0 %v237
        %v420 = vpop.f32.mrb[0].mxu0
        %v421 = vadd.f32 %v201, %v420
        %v422 = vpop.f32.mrb[0].mxu0
        %423 = vmatprep.mubr.f32.mxu0 0.0
        %424 = vmatmul.mubr.f32.gmra.mrb[0].mxu0 %v240
        %v425 = vpop.f32.mrb[0].mxu0
        %v426 = vadd.f32 %v201, %v425
        %v427 = vpop.f32.mrb[0].mxu0
        %428 = vmatprep.mubr.f32.mxu0 0.0
        %429 = vmatmul.mubr.f32.gmra.mrb[0].mxu0 %v243
        %v430 = vpop.f32.mrb[0].mxu0
        %v431 = vadd.f32 %v201, %v430
        %v432 = vpop.f32.mrb[0].mxu0
        %433 = vmatprep.mubr.f32.mxu0 0.0
        %434 = vmatmul.mubr.f32.gmra.mrb[0].mxu0 %v246
        %v435 = vpop.f32.mrb[0].mxu0
        %v436 = vadd.f32 %v201, %v435
        %v437 = vpop.f32.mrb[0].mxu0
        %438 = vmatprep.mubr.f32.mxu0 0.0
        %439 = vmatmul.mubr.f32.gmra.mrb[0].mxu0 %v249
        %v440 = vpop.f32.mrb[0].mxu0
        %v441 = vadd.f32 %v201, %v440
        %v442 = vpop.f32.mrb[0].mxu0
        %443 = vmatprep.mubr.f32.mxu0 0.0
        %444 = vmatmul.mubr.f32.gmra.mrb[0].mxu0 %v252
        %v445 = vpop.f32.mrb[0].mxu0
        %v446 = vadd.f32 %v201, %v445
        %v447 = vpop.f32.mrb[0].mxu0
        %448 = vmatprep.mubr.f32.mxu0 0.0
        %449 = vmatmul.mubr.f32.gmra.mrb[0].mxu0 %v255
        %v450 = vpop.f32.mrb[0].mxu0
        %v451 = vadd.f32 %v201, %v450
        %v452 = vpop.f32.mrb[0].mxu0
        %453 = vmatprep.mubr.f32.mxu0 0.0
        %454 = vmatmul.mubr.f32.gmra.mrb[0].mxu0 %v258
        %v455 = vpop.f32.mrb[0].mxu0
        %v456 = vadd.f32 %v201, %v455
        %v457 = vpop.f32.mrb[0].mxu0
        %458 = vmatprep.mubr.f32.mxu0 0.0
        %459 = vmatmul.mubr.f32.gmra.mrb[0].mxu0 %v261
        %v460 = vpop.f32.mrb[0].mxu0
        %v461 = vadd.f32 %v201, %v460
        %v462 = vpop.f32.mrb[0].mxu0
        %463 = vmatprep.mubr.f32.mxu0 0.0
        %464 = vmatmul.mubr.f32.gmra.mrb[0].mxu0 %v264
        %v465 = vpop.f32.mrb[0].mxu0
        %v466 = vadd.f32 %v201, %v465
        %v467 = vpop.f32.mrb[0].mxu0
        %468 = vmatprep.mubr.f32.mxu0 0.0
        %469 = vmatmul.mubr.f32.gmra.mrb[0].mxu0 %v267
        %v470 = vpop.f32.mrb[0].mxu0
        %v471 = vadd.f32 %v201, %v470
        %v472 = vpop.f32.mrb[0].mxu0
        %473 = vmatprep.mubr.f32.mxu0 0.0
        %474 = vmatmul.mubr.f32.gmra.mrb[0].mxu0 %v270
        %v475 = vpop.f32.mrb[0].mxu0
        %v476 = vadd.f32 %v201, %v475
        %v477 = vpop.f32.mrb[0].mxu0
        %478 = vmatprep.mubr.f32.mxu0 0.0
        %479 = vmatmul.mubr.f32.gmra.mrb[0].mxu0 %v273
        %v480 = vpop.f32.mrb[0].mxu0
        %v481 = vadd.f32 %v201, %v480
        %v482 = vpop.f32.mrb[0].mxu0
        %483 = vmatprep.mubr.f32.mxu0 0.0
        %484 = vmatmul.mubr.f32.gmra.mrb[0].mxu0 %v276
        %v485 = vpop.f32.mrb[0].mxu0
        %v486 = vadd.f32 %v201, %v485
        %v487 = vpop.f32.mrb[0].mxu0
        %488 = vmatprep.mubr.f32.mxu0 0.0
        %489 = vmatmul.mubr.f32.gmra.mrb[0].mxu0 %v279
        %v490 = vpop.f32.mrb[0].mxu0
        %v491 = vadd.f32 %v201, %v490
        %v492 = vpop.f32.mrb[0].mxu0
        %493 = vmatprep.mubr.f32.mxu0 0.0
        %494 = vmatmul.mubr.f32.gmra.mrb[0].mxu0 %v282
        %v495 = vpop.f32.mrb[0].mxu0
        %v496 = vadd.f32 %v201, %v495
        %v497 = vpop.f32.mrb[0].mxu0
        %498 = vmatprep.mubr.f32.mxu0 0.0
        %499 = vmatmul.mubr.f32.gmra.mrb[0].mxu0 %v285
        %v500 = vpop.f32.mrb[0].mxu0
        %v501 = vadd.f32 %v201, %v500
        %v502 = vpop.f32.mrb[0].mxu0
        %503 = vmatprep.mubr.f32.mxu0 0.0
        %504 = vmatmul.mubr.f32.gmra.mrb[0].mxu0 %v288
        %v505 = vpop.f32.mrb[0].mxu0
        %v506 = vadd.f32 %v201, %v505
        %v507 = vpop.f32.mrb[0].mxu0
        %508 = vmatprep.mubr.f32.mxu0 0.0
        %509 = vmatmul.mubr.f32.gmra.mrb[0].mxu0 %v291
        %v510 = vpop.f32.mrb[0].mxu0
        %v511 = vadd.f32 %v201, %v510
        %v512 = vpop.f32.mrb[0].mxu0
        %513 = vmatprep.mubr.f32.mxu0 0.0
        %514 = vmatmul.mubr.f32.gmra.mrb[0].mxu0 %v294
        %v515 = vpop.f32.mrb[0].mxu0
        %v516 = vadd.f32 %v201, %v515
        %v517 = vpop.f32.mrb[0].mxu0
        %518 = vmatprep.mubr.f32.mxu0 0.0
        %519 = vmatmul.mubr.f32.gmra.mrb[0].mxu0 %v297
        %v520 = vpop.f32.mrb[0].mxu0
        %v521 = vadd.f32 %v201, %v520
        %v522 = vpop.f32.mrb[0].mxu0
        %523 = vdwg.mxu0
        %v524 = vtanh.pop %v366
        %v525 = vtanh.pop %v371
        %v526 = vtanh.pop %v376
        %v527 = vtanh.pop %v381
        %v528 = vtanh.pop %v386
        %v529 = vtanh.pop %v391
        %v530 = vtanh.pop %v396
        %v531 = vtanh.pop %v401
        %v532 = vtanh.pop %v406
        %v533 = vtanh.pop %v411
        %v534 = vtanh.pop %v416
        %v535 = vtanh.pop %v421
        %v536 = vtanh.pop %v426
        %v537 = vtanh.pop %v431
        %v538 = vtanh.pop %v436
        %v539 = vtanh.pop %v441
        %v540 = vtanh.pop %v446
        %v541 = vtanh.pop %v451
        %v542 = vtanh.pop %v456
        %v543 = vtanh.pop %v461
        %v544 = vtanh.pop %v466
        %v545 = vtanh.pop %v471
        %v546 = vtanh.pop %v476
        %v547 = vtanh.pop %v481
        %v548 = vtanh.pop %v486
        %v549 = vtanh.pop %v491
        %v550 = vtanh.pop %v496
        %v551 = vtanh.pop %v501
        %v552 = vtanh.pop %v506
        %v553 = vtanh.pop %v511
        %v554 = vtanh.pop %v516
        %v555 = vtanh.pop %v521
        %v556 = vlaneseq
        %v557 = vshrl.u32 %v556, 7
        %v558 = vsub.s32 1, %v557
        %v559 = vrot.slane %v197, %v558
        %vm560 = vcmask 523264
        %v562 = vsel %vm560, %v524, 0
        %v565 = vsel %vm560, %v525, 0
        %v568 = vsel %vm560, %v526, 0
        %v571 = vsel %vm560, %v527, 0
        %v574 = vsel %vm560, %v528, 0
        %v577 = vsel %vm560, %v529, 0
        %v580 = vsel %vm560, %v530, 0
        %v583 = vsel %vm560, %v531, 0
        %v586 = vsel %vm560, %v532, 0
        %v589 = vsel %vm560, %v533, 0
        %v592 = vsel %vm560, %v534, 0
        %v595 = vsel %vm560, %v535, 0
        %v598 = vsel %vm560, %v536, 0
        %v601 = vsel %vm560, %v537, 0
        %v604 = vsel %vm560, %v538, 0
        %v607 = vsel %vm560, %v539, 0
        %v610 = vsel %vm560, %v540, 0
        %v613 = vsel %vm560, %v541, 0
        %v616 = vsel %vm560, %v542, 0
        %v619 = vsel %vm560, %v543, 0
        %v622 = vsel %vm560, %v544, 0
        %v625 = vsel %vm560, %v545, 0
        %v628 = vsel %vm560, %v546, 0
        %v631 = vsel %vm560, %v547, 0
        %v634 = vsel %vm560, %v548, 0
        %v637 = vsel %vm560, %v549, 0
        %v640 = vsel %vm560, %v550, 0
        %v643 = vsel %vm560, %v551, 0
        %v646 = vsel %vm560, %v552, 0
        %v649 = vsel %vm560, %v553, 0
        %v652 = vsel %vm560, %v554, 0
        %v655 = vsel %vm560, %v555, 0
        %657 = vmatprep.subr.mxu0 0.0
        %658 = vmatpush1.msra.mxu0 %v181
        %659 = vmatprep.subr.mxu0 0.0
        %660 = vmatpush1.msra.mxu0 %v182
        %661 = vmatprep.subr.mxu0 0.0
        %662 = vmatpush1.msra.mxu0 %v183
        %663 = vmatprep.subr.mxu0 0.0
        %664 = vmatpush1.msra.mxu0 %v184
        %665 = vmatprep.subr.mxu0 0.0
        %666 = vmatpush1.msra.mxu0 %v185
        %667 = vmatprep.subr.mxu0 0.0
        %668 = vmatpush1.msra.mxu0 %v186
        %669 = vmatprep.subr.mxu0 0.0
        %670 = vmatpush1.msra.mxu0 %v187
        %671 = vmatprep.subr.mxu0 0.0
        %672 = vmatpush1.msra.mxu0 %v188
        %673 = vmatprep.subr.mxu0 0.0
        %674 = vmatpush1.msra.mxu0 0.0
        %675 = vmatprep.subr.mxu0 0.0
        %676 = vmatpush1.msra.mxu0 0.0
        %677 = vmatprep.subr.mxu0 0.0
        %678 = vmatpush1.msra.mxu0 0.0
        %679 = vmatprep.subr.mxu0 0.0
        %680 = vmatpush1.msra.mxu0 0.0
        %681 = vmatprep.subr.mxu0 0.0
        %682 = vmatpush1.msra.mxu0 0.0
        %683 = vmatprep.subr.mxu0 0.0
        %684 = vmatpush1.msra.mxu0 0.0
        %685 = vmatprep.subr.mxu0 0.0
        %686 = vmatpush1.msra.mxu0 0.0
        %687 = vmatprep.subr.mxu0 0.0
        %688 = vmatpush1.msra.mxu0 0.0
        %689 = vmatprep.subr.mxu0 0.0
        %690 = vmatpush1.msra.mxu0 0.0
        %691 = vmatprep.subr.mxu0 0.0
        %692 = vmatpush1.msra.mxu0 0.0
        %693 = vmatprep.subr.mxu0 0.0
        %694 = vmatpush1.msra.mxu0 0.0
        %695 = vmatprep.subr.mxu0 0.0
        %696 = vmatpush1.msra.mxu0 0.0
        %697 = vmatprep.subr.mxu0 0.0
        %698 = vmatpush1.msra.mxu0 0.0
        %699 = vmatprep.subr.mxu0 0.0
        %700 = vmatpush1.msra.mxu0 0.0
        %701 = vmatprep.subr.mxu0 0.0
        %702 = vmatpush1.msra.mxu0 0.0
        %703 = vmatprep.subr.mxu0 0.0
        %704 = vmatpush1.msra.mxu0 0.0
        %705 = vmatprep.subr.mxu0 0.0
        %706 = vmatpush1.msra.mxu0 0.0
        %707 = vmatprep.subr.mxu0 0.0
        %708 = vmatpush1.msra.mxu0 0.0
        %709 = vmatprep.subr.mxu0 0.0
        %710 = vmatpush1.msra.mxu0 0.0
        %711 = vmatprep.subr.mxu0 0.0
        %712 = vmatpush1.msra.mxu0 0.0
        %713 = vmatprep.subr.mxu0 0.0
        %714 = vmatpush1.msra.mxu0 0.0
        %715 = vmatprep.subr.mxu0 0.0
        %716 = vmatpush1.msra.mxu0 0.0
        %717 = vmatprep.subr.mxu0 0.0
        %718 = vmatpush1.msra.mxu0 0.0
        %719 = vmatprep.subr.mxu0 0.0
        %720 = vmatpush1.msra.mxu0 0.0
        %721 = vmatprep.mubr.f32.mxu0 0.0
        %722 = vmatmul.mubr.f32.gmra.mrb[0].mxu0 %v562
        %v723 = vpop.f32.mrb[0].mxu0
        %v724 = vadd.f32 %v559, %v723
        %v725 = vpop.f32.mrb[0].mxu0
        %726 = vmatprep.mubr.f32.mxu0 0.0
        %727 = vmatmul.mubr.f32.gmra.mrb[0].mxu0 %v565
        %v728 = vpop.f32.mrb[0].mxu0
        %v729 = vadd.f32 %v559, %v728
        %v730 = vpop.f32.mrb[0].mxu0
        %731 = vmatprep.mubr.f32.mxu0 0.0
        %732 = vmatmul.mubr.f32.gmra.mrb[0].mxu0 %v568
        %v733 = vpop.f32.mrb[0].mxu0
        %v734 = vadd.f32 %v559, %v733
        %v735 = vpop.f32.mrb[0].mxu0
        %736 = vmatprep.mubr.f32.mxu0 0.0
        %737 = vmatmul.mubr.f32.gmra.mrb[0].mxu0 %v571
        %v738 = vpop.f32.mrb[0].mxu0
        %v739 = vadd.f32 %v559, %v738
        %v740 = vpop.f32.mrb[0].mxu0
        %741 = vmatprep.mubr.f32.mxu0 0.0
        %742 = vmatmul.mubr.f32.gmra.mrb[0].mxu0 %v574
        %v743 = vpop.f32.mrb[0].mxu0
        %v744 = vadd.f32 %v559, %v743
        %v745 = vpop.f32.mrb[0].mxu0
        %746 = vmatprep.mubr.f32.mxu0 0.0
        %747 = vmatmul.mubr.f32.gmra.mrb[0].mxu0 %v577
        %v748 = vpop.f32.mrb[0].mxu0
        %v749 = vadd.f32 %v559, %v748
        %v750 = vpop.f32.mrb[0].mxu0
        %751 = vmatprep.mubr.f32.mxu0 0.0
        %752 = vmatmul.mubr.f32.gmra.mrb[0].mxu0 %v580
        %v753 = vpop.f32.mrb[0].mxu0
        %v754 = vadd.f32 %v559, %v753
        %v755 = vpop.f32.mrb[0].mxu0
        %756 = vmatprep.mubr.f32.mxu0 0.0
        %757 = vmatmul.mubr.f32.gmra.mrb[0].mxu0 %v583
        %v758 = vpop.f32.mrb[0].mxu0
        %v759 = vadd.f32 %v559, %v758
        %v760 = vpop.f32.mrb[0].mxu0
        %761 = vmatprep.mubr.f32.mxu0 0.0
        %762 = vmatmul.mubr.f32.gmra.mrb[0].mxu0 %v586
        %v763 = vpop.f32.mrb[0].mxu0
        %v764 = vadd.f32 %v559, %v763
        %v765 = vpop.f32.mrb[0].mxu0
        %766 = vmatprep.mubr.f32.mxu0 0.0
        %767 = vmatmul.mubr.f32.gmra.mrb[0].mxu0 %v589
        %v768 = vpop.f32.mrb[0].mxu0
        %v769 = vadd.f32 %v559, %v768
        %v770 = vpop.f32.mrb[0].mxu0
        %771 = vmatprep.mubr.f32.mxu0 0.0
        %772 = vmatmul.mubr.f32.gmra.mrb[0].mxu0 %v592
        %v773 = vpop.f32.mrb[0].mxu0
        %v774 = vadd.f32 %v559, %v773
        %v775 = vpop.f32.mrb[0].mxu0
        %776 = vmatprep.mubr.f32.mxu0 0.0
        %777 = vmatmul.mubr.f32.gmra.mrb[0].mxu0 %v595
        %v778 = vpop.f32.mrb[0].mxu0
        %v779 = vadd.f32 %v559, %v778
        %v780 = vpop.f32.mrb[0].mxu0
        %781 = vmatprep.mubr.f32.mxu0 0.0
        %782 = vmatmul.mubr.f32.gmra.mrb[0].mxu0 %v598
        %v783 = vpop.f32.mrb[0].mxu0
        %v784 = vadd.f32 %v559, %v783
        %v785 = vpop.f32.mrb[0].mxu0
        %786 = vmatprep.mubr.f32.mxu0 0.0
        %787 = vmatmul.mubr.f32.gmra.mrb[0].mxu0 %v601
        %v788 = vpop.f32.mrb[0].mxu0
        %v789 = vadd.f32 %v559, %v788
        %v790 = vpop.f32.mrb[0].mxu0
        %791 = vmatprep.mubr.f32.mxu0 0.0
        %792 = vmatmul.mubr.f32.gmra.mrb[0].mxu0 %v604
        %v793 = vpop.f32.mrb[0].mxu0
        %v794 = vadd.f32 %v559, %v793
        %v795 = vpop.f32.mrb[0].mxu0
        %796 = vmatprep.mubr.f32.mxu0 0.0
        %797 = vmatmul.mubr.f32.gmra.mrb[0].mxu0 %v607
        %v798 = vpop.f32.mrb[0].mxu0
        %v799 = vadd.f32 %v559, %v798
        %v800 = vpop.f32.mrb[0].mxu0
        %801 = vmatprep.mubr.f32.mxu0 0.0
        %802 = vmatmul.mubr.f32.gmra.mrb[0].mxu0 %v610
        %v803 = vpop.f32.mrb[0].mxu0
        %v804 = vadd.f32 %v559, %v803
        %v805 = vpop.f32.mrb[0].mxu0
        %806 = vmatprep.mubr.f32.mxu0 0.0
        %807 = vmatmul.mubr.f32.gmra.mrb[0].mxu0 %v613
        %v808 = vpop.f32.mrb[0].mxu0
        %v809 = vadd.f32 %v559, %v808
        %v810 = vpop.f32.mrb[0].mxu0
        %811 = vmatprep.mubr.f32.mxu0 0.0
        %812 = vmatmul.mubr.f32.gmra.mrb[0].mxu0 %v616
        %v813 = vpop.f32.mrb[0].mxu0
        %v814 = vadd.f32 %v559, %v813
        %v815 = vpop.f32.mrb[0].mxu0
        %816 = vmatprep.mubr.f32.mxu0 0.0
        %817 = vmatmul.mubr.f32.gmra.mrb[0].mxu0 %v619
        %v818 = vpop.f32.mrb[0].mxu0
        %v819 = vadd.f32 %v559, %v818
        %v820 = vpop.f32.mrb[0].mxu0
        %821 = vmatprep.mubr.f32.mxu0 0.0
        %822 = vmatmul.mubr.f32.gmra.mrb[0].mxu0 %v622
        %v823 = vpop.f32.mrb[0].mxu0
        %v824 = vadd.f32 %v559, %v823
        %v825 = vpop.f32.mrb[0].mxu0
        %826 = vmatprep.mubr.f32.mxu0 0.0
        %827 = vmatmul.mubr.f32.gmra.mrb[0].mxu0 %v625
        %v828 = vpop.f32.mrb[0].mxu0
        %v829 = vadd.f32 %v559, %v828
        %v830 = vpop.f32.mrb[0].mxu0
        %831 = vmatprep.mubr.f32.mxu0 0.0
        %832 = vmatmul.mubr.f32.gmra.mrb[0].mxu0 %v628
        %v833 = vpop.f32.mrb[0].mxu0
        %v834 = vadd.f32 %v559, %v833
        %v835 = vpop.f32.mrb[0].mxu0
        %836 = vmatprep.mubr.f32.mxu0 0.0
        %837 = vmatmul.mubr.f32.gmra.mrb[0].mxu0 %v631
        %v838 = vpop.f32.mrb[0].mxu0
        %v839 = vadd.f32 %v559, %v838
        %v840 = vpop.f32.mrb[0].mxu0
        %841 = vmatprep.mubr.f32.mxu0 0.0
        %842 = vmatmul.mubr.f32.gmra.mrb[0].mxu0 %v634
        %v843 = vpop.f32.mrb[0].mxu0
        %v844 = vadd.f32 %v559, %v843
        %v845 = vpop.f32.mrb[0].mxu0
        %846 = vmatprep.mubr.f32.mxu0 0.0
        %847 = vmatmul.mubr.f32.gmra.mrb[0].mxu0 %v637
        %v848 = vpop.f32.mrb[0].mxu0
        %v849 = vadd.f32 %v559, %v848
        %v850 = vpop.f32.mrb[0].mxu0
        %851 = vmatprep.mubr.f32.mxu0 0.0
        %852 = vmatmul.mubr.f32.gmra.mrb[0].mxu0 %v640
        %v853 = vpop.f32.mrb[0].mxu0
        %v854 = vadd.f32 %v559, %v853
        %v855 = vpop.f32.mrb[0].mxu0
        %856 = vmatprep.mubr.f32.mxu0 0.0
        %857 = vmatmul.mubr.f32.gmra.mrb[0].mxu0 %v643
        %v858 = vpop.f32.mrb[0].mxu0
        %v859 = vadd.f32 %v559, %v858
        %v860 = vpop.f32.mrb[0].mxu0
        %861 = vmatprep.mubr.f32.mxu0 0.0
        %862 = vmatmul.mubr.f32.gmra.mrb[0].mxu0 %v646
        %v863 = vpop.f32.mrb[0].mxu0
        %v864 = vadd.f32 %v559, %v863
        %v865 = vpop.f32.mrb[0].mxu0
        %866 = vmatprep.mubr.f32.mxu0 0.0
        %867 = vmatmul.mubr.f32.gmra.mrb[0].mxu0 %v649
        %v868 = vpop.f32.mrb[0].mxu0
        %v869 = vadd.f32 %v559, %v868
        %v870 = vpop.f32.mrb[0].mxu0
        %871 = vmatprep.mubr.f32.mxu0 0.0
        %872 = vmatmul.mubr.f32.gmra.mrb[0].mxu0 %v652
        %v873 = vpop.f32.mrb[0].mxu0
        %v874 = vadd.f32 %v559, %v873
        %v875 = vpop.f32.mrb[0].mxu0
        %876 = vmatprep.mubr.f32.mxu0 0.0
        %877 = vmatmul.mubr.f32.gmra.mrb[0].mxu0 %v655
        %v878 = vpop.f32.mrb[0].mxu0
        %v879 = vadd.f32 %v559, %v878
        %v880 = vpop.f32.mrb[0].mxu0
        %881 = vdwg.mxu0
        %v882 = vtanh.pop %v724
        %v883 = vtanh.pop %v729
        %v884 = vtanh.pop %v734
        %v885 = vtanh.pop %v739
        %v886 = vtanh.pop %v744
        %v887 = vtanh.pop %v749
        %v888 = vtanh.pop %v754
        %v889 = vtanh.pop %v759
        %v890 = vtanh.pop %v764
        %v891 = vtanh.pop %v769
        %v892 = vtanh.pop %v774
        %v893 = vtanh.pop %v779
        %v894 = vtanh.pop %v784
        %v895 = vtanh.pop %v789
        %v896 = vtanh.pop %v794
        %v897 = vtanh.pop %v799
        %v898 = vtanh.pop %v804
        %v899 = vtanh.pop %v809
        %v900 = vtanh.pop %v814
        %v901 = vtanh.pop %v819
        %v902 = vtanh.pop %v824
        %v903 = vtanh.pop %v829
        %v904 = vtanh.pop %v834
        %v905 = vtanh.pop %v839
        %v906 = vtanh.pop %v844
        %v907 = vtanh.pop %v849
        %v908 = vtanh.pop %v854
        %v909 = vtanh.pop %v859
        %v910 = vtanh.pop %v864
        %v911 = vtanh.pop %v869
        %v912 = vtanh.pop %v874
        %v913 = vtanh.pop %v879
        %v914 = vlaneseq
        %v915 = vshrl.u32 %v914, 7
        %v916 = vsub.s32 2, %v915
        %v917 = vrot.slane %v197, %v916
        %v919 = vsel %vm560, %v882, 0
        %v922 = vsel %vm560, %v883, 0
        %v925 = vsel %vm560, %v884, 0
        %v928 = vsel %vm560, %v885, 0
        %v931 = vsel %vm560, %v886, 0
        %v934 = vsel %vm560, %v887, 0
        %v937 = vsel %vm560, %v888, 0
        %v940 = vsel %vm560, %v889, 0
        %v943 = vsel %vm560, %v890, 0
        %v946 = vsel %vm560, %v891, 0
        %v949 = vsel %vm560, %v892, 0
        %v952 = vsel %vm560, %v893, 0
        %v955 = vsel %vm560, %v894, 0
        %v958 = vsel %vm560, %v895, 0
        %v961 = vsel %vm560, %v896, 0
        %v964 = vsel %vm560, %v897, 0
        %v967 = vsel %vm560, %v898, 0
        %v970 = vsel %vm560, %v899, 0
        %v973 = vsel %vm560, %v900, 0
        %v976 = vsel %vm560, %v901, 0
        %v979 = vsel %vm560, %v902, 0
        %v982 = vsel %vm560, %v903, 0
        %v985 = vsel %vm560, %v904, 0
        %v988 = vsel %vm560, %v905, 0
        %v991 = vsel %vm560, %v906, 0
        %v994 = vsel %vm560, %v907, 0
        %v997 = vsel %vm560, %v908, 0
        %v1000 = vsel %vm560, %v909, 0
        %v1003 = vsel %vm560, %v910, 0
        %v1006 = vsel %vm560, %v911, 0
        %v1009 = vsel %vm560, %v912, 0
        %v1012 = vsel %vm560, %v913, 0
        %1014 = vmatprep.subr.mxu0 0.0
        %1015 = vmatpush1.msra.mxu0 %v189
        %1016 = vmatprep.subr.mxu0 0.0
        %1017 = vmatpush1.msra.mxu0 %v190
        %1018 = vmatprep.subr.mxu0 0.0
        %1019 = vmatpush1.msra.mxu0 %v191
        %1020 = vmatprep.subr.mxu0 0.0
        %1021 = vmatpush1.msra.mxu0 %v192
        %1022 = vmatprep.subr.mxu0 0.0
        %1023 = vmatpush1.msra.mxu0 %v193
        %1024 = vmatprep.subr.mxu0 0.0
        %1025 = vmatpush1.msra.mxu0 %v194
        %1026 = vmatprep.subr.mxu0 0.0
        %1027 = vmatpush1.msra.mxu0 %v195
        %1028 = vmatprep.subr.mxu0 0.0
        %1029 = vmatpush1.msra.mxu0 %v196
        %1030 = vmatprep.subr.mxu0 0.0
        %1031 = vmatpush1.msra.mxu0 0.0
        %1032 = vmatprep.subr.mxu0 0.0
        %1033 = vmatpush1.msra.mxu0 0.0
        %1034 = vmatprep.subr.mxu0 0.0
        %1035 = vmatpush1.msra.mxu0 0.0
        %1036 = vmatprep.subr.mxu0 0.0
        %1037 = vmatpush1.msra.mxu0 0.0
        %1038 = vmatprep.subr.mxu0 0.0
        %1039 = vmatpush1.msra.mxu0 0.0
        %1040 = vmatprep.subr.mxu0 0.0
        %1041 = vmatpush1.msra.mxu0 0.0
        %1042 = vmatprep.subr.mxu0 0.0
        %1043 = vmatpush1.msra.mxu0 0.0
        %1044 = vmatprep.subr.mxu0 0.0
        %1045 = vmatpush1.msra.mxu0 0.0
        %1046 = vmatprep.subr.mxu0 0.0
        %1047 = vmatpush1.msra.mxu0 0.0
        %1048 = vmatprep.subr.mxu0 0.0
        %1049 = vmatpush1.msra.mxu0 0.0
        %1050 = vmatprep.subr.mxu0 0.0
        %1051 = vmatpush1.msra.mxu0 0.0
        %1052 = vmatprep.subr.mxu0 0.0
        %1053 = vmatpush1.msra.mxu0 0.0
        %1054 = vmatprep.subr.mxu0 0.0
        %1055 = vmatpush1.msra.mxu0 0.0
        %1056 = vmatprep.subr.mxu0 0.0
        %1057 = vmatpush1.msra.mxu0 0.0
        %1058 = vmatprep.subr.mxu0 0.0
        %1059 = vmatpush1.msra.mxu0 0.0
        %1060 = vmatprep.subr.mxu0 0.0
        %1061 = vmatpush1.msra.mxu0 0.0
        %1062 = vmatprep.subr.mxu0 0.0
        %1063 = vmatpush1.msra.mxu0 0.0
        %1064 = vmatprep.subr.mxu0 0.0
        %1065 = vmatpush1.msra.mxu0 0.0
        %1066 = vmatprep.subr.mxu0 0.0
        %1067 = vmatpush1.msra.mxu0 0.0
        %1068 = vmatprep.subr.mxu0 0.0
        %1069 = vmatpush1.msra.mxu0 0.0
        %1070 = vmatprep.subr.mxu0 0.0
        %1071 = vmatpush1.msra.mxu0 0.0
        %1072 = vmatprep.subr.mxu0 0.0
        %1073 = vmatpush1.msra.mxu0 0.0
        %1074 = vmatprep.subr.mxu0 0.0
        %1075 = vmatpush1.msra.mxu0 0.0
        %1076 = vmatprep.subr.mxu0 0.0
        %1077 = vmatpush1.msra.mxu0 0.0
        %1078 = vmatprep.mubr.f32.mxu0 0.0
        %1079 = vmatmul.mubr.f32.gmra.mrb[0].mxu0 %v919
        %v1080 = vpop.f32.mrb[0].mxu0
        %v1081 = vadd.f32 %v917, %v1080
        %v1082 = vpop.f32.mrb[0].mxu0
        %1083 = vmatprep.mubr.f32.mxu0 0.0
        %1084 = vmatmul.mubr.f32.gmra.mrb[0].mxu0 %v922
        %v1085 = vpop.f32.mrb[0].mxu0
        %v1086 = vadd.f32 %v917, %v1085
        %v1087 = vpop.f32.mrb[0].mxu0
        %1088 = vmatprep.mubr.f32.mxu0 0.0
        %1089 = vmatmul.mubr.f32.gmra.mrb[0].mxu0 %v925
        %v1090 = vpop.f32.mrb[0].mxu0
        %v1091 = vadd.f32 %v917, %v1090
        %v1092 = vpop.f32.mrb[0].mxu0
        %1093 = vmatprep.mubr.f32.mxu0 0.0
        %1094 = vmatmul.mubr.f32.gmra.mrb[0].mxu0 %v928
        %v1095 = vpop.f32.mrb[0].mxu0
        %v1096 = vadd.f32 %v917, %v1095
        %v1097 = vpop.f32.mrb[0].mxu0
        %1098 = vmatprep.mubr.f32.mxu0 0.0
        %1099 = vmatmul.mubr.f32.gmra.mrb[0].mxu0 %v931
        %v1100 = vpop.f32.mrb[0].mxu0
        %v1101 = vadd.f32 %v917, %v1100
        %v1102 = vpop.f32.mrb[0].mxu0
        %1103 = vmatprep.mubr.f32.mxu0 0.0
        %1104 = vmatmul.mubr.f32.gmra.mrb[0].mxu0 %v934
        %v1105 = vpop.f32.mrb[0].mxu0
        %v1106 = vadd.f32 %v917, %v1105
        %v1107 = vpop.f32.mrb[0].mxu0
        %1108 = vmatprep.mubr.f32.mxu0 0.0
        %1109 = vmatmul.mubr.f32.gmra.mrb[0].mxu0 %v937
        %v1110 = vpop.f32.mrb[0].mxu0
        %v1111 = vadd.f32 %v917, %v1110
        %v1112 = vpop.f32.mrb[0].mxu0
        %1113 = vmatprep.mubr.f32.mxu0 0.0
        %1114 = vmatmul.mubr.f32.gmra.mrb[0].mxu0 %v940
        %v1115 = vpop.f32.mrb[0].mxu0
        %v1116 = vadd.f32 %v917, %v1115
        %v1117 = vpop.f32.mrb[0].mxu0
        %1118 = vmatprep.mubr.f32.mxu0 0.0
        %1119 = vmatmul.mubr.f32.gmra.mrb[0].mxu0 %v943
        %v1120 = vpop.f32.mrb[0].mxu0
        %v1121 = vadd.f32 %v917, %v1120
        %v1122 = vpop.f32.mrb[0].mxu0
        %1123 = vmatprep.mubr.f32.mxu0 0.0
        %1124 = vmatmul.mubr.f32.gmra.mrb[0].mxu0 %v946
        %v1125 = vpop.f32.mrb[0].mxu0
        %v1126 = vadd.f32 %v917, %v1125
        %v1127 = vpop.f32.mrb[0].mxu0
        %1128 = vmatprep.mubr.f32.mxu0 0.0
        %1129 = vmatmul.mubr.f32.gmra.mrb[0].mxu0 %v949
        %v1130 = vpop.f32.mrb[0].mxu0
        %v1131 = vadd.f32 %v917, %v1130
        %v1132 = vpop.f32.mrb[0].mxu0
        %1133 = vmatprep.mubr.f32.mxu0 0.0
        %1134 = vmatmul.mubr.f32.gmra.mrb[0].mxu0 %v952
        %v1135 = vpop.f32.mrb[0].mxu0
        %v1136 = vadd.f32 %v917, %v1135
        %v1137 = vpop.f32.mrb[0].mxu0
        %1138 = vmatprep.mubr.f32.mxu0 0.0
        %1139 = vmatmul.mubr.f32.gmra.mrb[0].mxu0 %v955
        %v1140 = vpop.f32.mrb[0].mxu0
        %v1141 = vadd.f32 %v917, %v1140
        %v1142 = vpop.f32.mrb[0].mxu0
        %1143 = vmatprep.mubr.f32.mxu0 0.0
        %1144 = vmatmul.mubr.f32.gmra.mrb[0].mxu0 %v958
        %v1145 = vpop.f32.mrb[0].mxu0
        %v1146 = vadd.f32 %v917, %v1145
        %v1147 = vpop.f32.mrb[0].mxu0
        %1148 = vmatprep.mubr.f32.mxu0 0.0
        %1149 = vmatmul.mubr.f32.gmra.mrb[0].mxu0 %v961
        %v1150 = vpop.f32.mrb[0].mxu0
        %v1151 = vadd.f32 %v917, %v1150
        %v1152 = vpop.f32.mrb[0].mxu0
        %1153 = vmatprep.mubr.f32.mxu0 0.0
        %1154 = vmatmul.mubr.f32.gmra.mrb[0].mxu0 %v964
        %v1155 = vpop.f32.mrb[0].mxu0
        %v1156 = vadd.f32 %v917, %v1155
        %v1157 = vpop.f32.mrb[0].mxu0
        %1158 = vmatprep.mubr.f32.mxu0 0.0
        %1159 = vmatmul.mubr.f32.gmra.mrb[0].mxu0 %v967
        %v1160 = vpop.f32.mrb[0].mxu0
        %v1161 = vadd.f32 %v917, %v1160
        %v1162 = vpop.f32.mrb[0].mxu0
        %1163 = vmatprep.mubr.f32.mxu0 0.0
        %1164 = vmatmul.mubr.f32.gmra.mrb[0].mxu0 %v970
        %v1165 = vpop.f32.mrb[0].mxu0
        %v1166 = vadd.f32 %v917, %v1165
        %v1167 = vpop.f32.mrb[0].mxu0
        %1168 = vmatprep.mubr.f32.mxu0 0.0
        %1169 = vmatmul.mubr.f32.gmra.mrb[0].mxu0 %v973
        %v1170 = vpop.f32.mrb[0].mxu0
        %v1171 = vadd.f32 %v917, %v1170
        %v1172 = vpop.f32.mrb[0].mxu0
        %1173 = vmatprep.mubr.f32.mxu0 0.0
        %1174 = vmatmul.mubr.f32.gmra.mrb[0].mxu0 %v976
        %v1175 = vpop.f32.mrb[0].mxu0
        %v1176 = vadd.f32 %v917, %v1175
        %v1177 = vpop.f32.mrb[0].mxu0
        %1178 = vmatprep.mubr.f32.mxu0 0.0
        %1179 = vmatmul.mubr.f32.gmra.mrb[0].mxu0 %v979
        %v1180 = vpop.f32.mrb[0].mxu0
        %v1181 = vadd.f32 %v917, %v1180
        %v1182 = vpop.f32.mrb[0].mxu0
        %1183 = vmatprep.mubr.f32.mxu0 0.0
        %1184 = vmatmul.mubr.f32.gmra.mrb[0].mxu0 %v982
        %v1185 = vpop.f32.mrb[0].mxu0
        %v1186 = vadd.f32 %v917, %v1185
        %v1187 = vpop.f32.mrb[0].mxu0
        %1188 = vmatprep.mubr.f32.mxu0 0.0
        %1189 = vmatmul.mubr.f32.gmra.mrb[0].mxu0 %v985
        %v1190 = vpop.f32.mrb[0].mxu0
        %v1191 = vadd.f32 %v917, %v1190
        %v1192 = vpop.f32.mrb[0].mxu0
        %1193 = vmatprep.mubr.f32.mxu0 0.0
        %1194 = vmatmul.mubr.f32.gmra.mrb[0].mxu0 %v988
        %v1195 = vpop.f32.mrb[0].mxu0
        %v1196 = vadd.f32 %v917, %v1195
        %v1197 = vpop.f32.mrb[0].mxu0
        %1198 = vmatprep.mubr.f32.mxu0 0.0
        %1199 = vmatmul.mubr.f32.gmra.mrb[0].mxu0 %v991
        %v1200 = vpop.f32.mrb[0].mxu0
        %v1201 = vadd.f32 %v917, %v1200
        %v1202 = vpop.f32.mrb[0].mxu0
        %1203 = vmatprep.mubr.f32.mxu0 0.0
        %1204 = vmatmul.mubr.f32.gmra.mrb[0].mxu0 %v994
        %v1205 = vpop.f32.mrb[0].mxu0
        %v1206 = vadd.f32 %v917, %v1205
        %v1207 = vpop.f32.mrb[0].mxu0
        %1208 = vmatprep.mubr.f32.mxu0 0.0
        %1209 = vmatmul.mubr.f32.gmra.mrb[0].mxu0 %v997
        %v1210 = vpop.f32.mrb[0].mxu0
        %v1211 = vadd.f32 %v917, %v1210
        %v1212 = vpop.f32.mrb[0].mxu0
        %1213 = vmatprep.mubr.f32.mxu0 0.0
        %1214 = vmatmul.mubr.f32.gmra.mrb[0].mxu0 %v1000
        %v1215 = vpop.f32.mrb[0].mxu0
        %v1216 = vadd.f32 %v917, %v1215
        %v1217 = vpop.f32.mrb[0].mxu0
        %1218 = vmatprep.mubr.f32.mxu0 0.0
        %1219 = vmatmul.mubr.f32.gmra.mrb[0].mxu0 %v1003
        %v1220 = vpop.f32.mrb[0].mxu0
        %v1221 = vadd.f32 %v917, %v1220
        %v1222 = vpop.f32.mrb[0].mxu0
        %1223 = vmatprep.mubr.f32.mxu0 0.0
        %1224 = vmatmul.mubr.f32.gmra.mrb[0].mxu0 %v1006
        %v1225 = vpop.f32.mrb[0].mxu0
        %v1226 = vadd.f32 %v917, %v1225
        %v1227 = vpop.f32.mrb[0].mxu0
        %1228 = vmatprep.mubr.f32.mxu0 0.0
        %1229 = vmatmul.mubr.f32.gmra.mrb[0].mxu0 %v1009
        %v1230 = vpop.f32.mrb[0].mxu0
        %v1231 = vadd.f32 %v917, %v1230
        %v1232 = vpop.f32.mrb[0].mxu0
        %1233 = vmatprep.mubr.f32.mxu0 0.0
        %1234 = vmatmul.mubr.f32.gmra.mrb[0].mxu0 %v1012
        %v1235 = vpop.f32.mrb[0].mxu0
        %v1236 = vadd.f32 %v917, %v1235
        %v1237 = vpop.f32.mrb[0].mxu0
        %1238 = vdwg.mxu0
        %1239 = vst [vmem:[%s137] sm:$0xff] %v1081
        %1240 = vst [vmem:[%s137 + $0x8] sm:$0xff] %v1086
        %1241 = vst [vmem:[%s137 + $0x10] sm:$0xff] %v1091
        %1242 = vst [vmem:[%s137 + $0x18] sm:$0xff] %v1096
        %1243 = vst [vmem:[%s137 + $0x20] sm:$0xff] %v1101
        %1244 = vst [vmem:[%s137 + $0x28] sm:$0xff] %v1106
        %1245 = vst [vmem:[%s137 + $0x30] sm:$0xff] %v1111
        %1246 = vst [vmem:[%s137 + $0x38] sm:$0xff] %v1116
        %1247 = vst [vmem:[%s137 + $0x40] sm:$0xff] %v1121
        %1248 = vst [vmem:[%s137 + $0x48] sm:$0xff] %v1126
        %1249 = vst [vmem:[%s137 + $0x50] sm:$0xff] %v1131
        %1250 = vst [vmem:[%s137 + $0x58] sm:$0xff] %v1136
        %1251 = vst [vmem:[%s137 + $0x60] sm:$0xff] %v1141
        %1252 = vst [vmem:[%s137 + $0x68] sm:$0xff] %v1146
        %1253 = vst [vmem:[%s137 + $0x70] sm:$0xff] %v1151
        %1254 = vst [vmem:[%s137 + $0x78] sm:$0xff] %v1156
        %1255 = vst [vmem:[%s137 + $0x80] sm:$0xff] %v1161
        %1256 = vst [vmem:[%s137 + $0x88] sm:$0xff] %v1166
        %1257 = vst [vmem:[%s137 + $0x90] sm:$0xff] %v1171
        %1258 = vst [vmem:[%s137 + $0x98] sm:$0xff] %v1176
        %1259 = vst [vmem:[%s137 + $0xa0] sm:$0xff] %v1181
        %1260 = vst [vmem:[%s137 + $0xa8] sm:$0xff] %v1186
        %1261 = vst [vmem:[%s137 + $0xb0] sm:$0xff] %v1191
        %1262 = vst [vmem:[%s137 + $0xb8] sm:$0xff] %v1196
        %1263 = vst [vmem:[%s137 + $0xc0] sm:$0xff] %v1201
        %1264 = vst [vmem:[%s137 + $0xc8] sm:$0xff] %v1206
        %1265 = vst [vmem:[%s137 + $0xd0] sm:$0xff] %v1211
        %1266 = vst [vmem:[%s137 + $0xd8] sm:$0xff] %v1216
        %1267 = vst [vmem:[%s137 + $0xe0] sm:$0xff] %v1221
        %1268 = vst [vmem:[%s137 + $0xe8] sm:$0xff] %v1226
        %1269 = vst [vmem:[%s137 + $0xf0] sm:$0xff] %v1231
        %1270 = vst [vmem:[%s137 + $0xf8] sm:$0xff] %v1236
        %s1271 = sand.u32 %s71, 1
        %s1272 = scalar_lea.sflag [#allocation3], %s1271
        %s1273 = sand.u32 %s71, 1
        %s1274 = smul.addr %s1273, 256
        %s1275 = scalar_lea.vmem [#allocation2], %s1274
        // Predicated region
        $region29: #{tpu_custom_call.1} parent=27 // pred_check
          %p1276 = pneg %p81
        $region30: #{tpu_custom_call.1} parent=27 // pred_check_branch
          %1278 = sbr.rel (%p1276) target = $region32
        $region31: #{tpu_custom_call.1} parent=27 // pred_region
          %s1279 = smul.u32 32, %s16
          %s1281 = ssub.s32 4096, 4096
          %1282 = vsyncadd %s1272, %s1281
          %s1283 = smul.addr %s1279, 128
          %s1284 = scalar_lea.hbm %s2, %s1283
          %s1285 = sshll.u32 %s1275, 4
          %s1286 = int_to_ptr.vmem [resolvable:$true] %s1285
          %1291 = dma.vmem_to_hbm [thread:$0]  %s1286, 4096, %s1284, %s1272, 128, 128, 8
        $region32: #{tpu_custom_call.1} parent=27 // pred_fallthru
          _
      $region28: #{tpu_custom_call.1} parent=5 // pred_fallthru
        _
      %p1292 = scmp.le.s32.totalorder 2, %s11
      // Predicated region
      $region33: #{tpu_custom_call.1} parent=5 // pred_check
        %p1293 = pneg %p1292
      $region34: #{tpu_custom_call.1} parent=5 // pred_check_branch
        %1295 = sbr.rel (%p1293) target = $region36
      $region35: #{tpu_custom_call.1} parent=5 // pred_region
        %s1296 = ssub.s32 %s11, 2
        // Predicated region
        $region37: #{tpu_custom_call.1} parent=35 // pred_check
          %p1297 = pneg %p87
        $region38: #{tpu_custom_call.1} parent=35 // pred_check_branch
          %1299 = sbr.rel (%p1297) target = $region40
        $region39: #{tpu_custom_call.1} parent=35 // pred_region
          %s1300 = sand.u32 %s72, 1
          %s1301 = scalar_lea.sflag [#allocation3], %s1300
          %s1302 = sand.u32 %s72, 1
          %s1303 = smul.addr %s1302, 256
          %s1304 = scalar_lea.vmem [#allocation2], %s1303
          %1305 = dma.done %s1301, 4096
        $region40: #{tpu_custom_call.1} parent=35 // pred_fallthru
          _
      $region36: #{tpu_custom_call.1} parent=5 // pred_fallthru
        _
    $region6: #{tpu_custom_call.1} parent=1 // loop_footer
      %s15 = sadd.s32 1, %s11
    $region7: #{tpu_custom_call.1} parent=1 // loop_footer_branch
      %10 = sbr.rel target = $region3
    $region8: #{tpu_custom_call.1} parent=1 // loop_exit
      _
    %1306 = vsyncpa [#allocation3], 1
    %s1307 = scalar_lea.sflag [#allocation3], 1
    %1308 = vsyncpa %s1307, 1

</llo_original>
